<compile_context>
chip_gen: v7x
topology: tpu7x:2x2x1
jax: 0.10.0
libtpu: 0.0.40
codegen_flags: <defaults>
</compile_context>

<pallas_src>
import math
import functools

import jax
import jax.numpy as jnp
from jax.experimental import pallas as pl
from jax.experimental.pallas import tpu as pltpu


# ----------------------------------------------------------------------------
# Kernels
# ----------------------------------------------------------------------------
def _support_kernel(x_ref, w_ref, o_ref):
    # x_ref: (tm, F_in), w_ref: (F_in, F_out_pad), o_ref: (tm, F_out_pad)
    o_ref[...] = jnp.dot(
        x_ref[...], w_ref[...], preferred_element_type=jnp.float32
    ).astype(o_ref.dtype)


def _aggregate_kernel(adj_ref, sup_ref, o_ref, acc_ref):
    # adj_ref: (tm, tk), sup_ref: (tk, F_out_pad), o_ref: (tm, F_out_pad)
    # acc_ref: (tm, F_out_pad) f32 scratch, accumulated over the k grid axis.
    @pl.when(pl.program_id(2) == 0)
    def _():
        acc_ref[...] = jnp.zeros_like(acc_ref)

    acc_ref[...] += jnp.dot(
        adj_ref[...], sup_ref[...], preferred_element_type=jnp.float32
    )

    @pl.when(pl.program_id(2) == pl.num_programs(2) - 1)
    def _():
        o_ref[...] = acc_ref[...].astype(o_ref.dtype)


def _aggregate_bias_kernel(adj_ref, sup_ref, b_ref, o_ref, acc_ref):
    # Same as _aggregate_kernel plus a bias add at finalize time.
    @pl.when(pl.program_id(2) == 0)
    def _():
        acc_ref[...] = jnp.zeros_like(acc_ref)

    acc_ref[...] += jnp.dot(
        adj_ref[...], sup_ref[...], preferred_element_type=jnp.float32
    )

    @pl.when(pl.program_id(2) == pl.num_programs(2) - 1)
    def _():
        o_ref[...] = (acc_ref[...] + b_ref[...].astype(jnp.float32)).astype(
            o_ref.dtype
        )


# ----------------------------------------------------------------------------
# Wrapper
# ----------------------------------------------------------------------------
def _round_up(v, m):
    return ((v + m - 1) // m) * m


@functools.partial(jax.jit, static_argnames=("compute_dtype",))
def gcn_forward(x, adj, weight, bias=None, *, compute_dtype=jnp.bfloat16):
    """GCN forward: adj @ (x @ weight) (+ bias)."""
    B, N, F_in = x.shape
    F_out = weight.shape[1]
    out_dtype = x.dtype

    # --- Tile sizing (256 for the big adj matmul on v6e/v7x-sized MXUs; a
    #     single 128-wide tile when N is tiny).  All tiles are small enough to
    #     stay well inside v7x's 64 MiB VMEM with double buffering.
    tile = 256 if N > 128 else 128
    N_pad = _round_up(N, tile)
    tm = tk = tile
    F_out_pad = _round_up(F_out, 128)        # lane-dense output/weight

    itemsize_c = jnp.dtype(compute_dtype).itemsize
    itemsize_o = jnp.dtype(out_dtype).itemsize

    # --- Cast to bf16 compute dtype and zero-pad to tile boundaries.
    xc = x.astype(compute_dtype)
    adjc = adj.astype(compute_dtype)
    wc = weight.astype(compute_dtype)
    if N_pad != N:
        xc = jnp.pad(xc, ((0, 0), (0, N_pad - N), (0, 0)))
        adjc = jnp.pad(adjc, ((0, 0), (0, N_pad - N), (0, N_pad - N)))
    if F_out_pad != F_out:
        wc = jnp.pad(wc, ((0, 0), (0, F_out_pad - F_out)))

    compiler_params_2d = pltpu.CompilerParams(
        dimension_semantics=("parallel", "parallel"),
        vmem_limit_bytes=32 * 1024 * 1024,
    )
    compiler_params_3d = pltpu.CompilerParams(
        dimension_semantics=("parallel", "parallel", "arbitrary"),
        vmem_limit_bytes=32 * 1024 * 1024,
    )

    # --- Kernel 1: support = x @ W  (pre-computed once, stored in bf16).
    support = pl.pallas_call(
        _support_kernel,
        out_shape=jax.ShapeDtypeStruct((B, N_pad, F_out_pad), compute_dtype),
        grid_spec=pltpu.PrefetchScalarGridSpec(
            num_scalar_prefetch=0,
            grid=(B, N_pad // tm),
            in_specs=[
                pl.BlockSpec((pl.Squeezed(), tm, F_in), lambda b, i: (b, i, 0)),
                pl.BlockSpec((F_in, F_out_pad), lambda b, i: (0, 0)),
            ],
            out_specs=pl.BlockSpec(
                (pl.Squeezed(), tm, F_out_pad), lambda b, i: (b, i, 0)
            ),
        ),
        compiler_params=compiler_params_2d,
        cost_estimate=pl.CostEstimate(
            flops=2 * B * N_pad * F_in * F_out_pad,
            transcendentals=0,
            bytes_accessed=(
                B * N_pad * F_in * itemsize_c
                + F_in * F_out_pad * itemsize_c
                + B * N_pad * F_out_pad * itemsize_c
            ),
        ),
    )(xc, wc)

    # --- Kernel 2: out = adj @ support (+ bias), tiled with f32 accumulator.
    adj_spec = pl.BlockSpec((pl.Squeezed(), tm, tk), lambda b, i, k: (b, i, k))
    sup_spec = pl.BlockSpec(
        (pl.Squeezed(), tk, F_out_pad), lambda b, i, k: (b, k, 0)
    )
    out_spec = pl.BlockSpec(
        (pl.Squeezed(), tm, F_out_pad), lambda b, i, k: (b, i, 0)
    )
    cost2 = pl.CostEstimate(
        flops=2 * B * N_pad * N_pad * F_out_pad,
        transcendentals=0,
        bytes_accessed=(
            B * N_pad * N_pad * itemsize_c
            + B * N_pad * F_out_pad * itemsize_c
            + B * N_pad * F_out_pad * itemsize_o
        ),
    )

    if bias is None:
        out_padded = pl.pallas_call(
            _aggregate_kernel,
            out_shape=jax.ShapeDtypeStruct((B, N_pad, F_out_pad), out_dtype),
            grid_spec=pltpu.PrefetchScalarGridSpec(
                num_scalar_prefetch=0,
                grid=(B, N_pad // tm, N_pad // tk),
                in_specs=[adj_spec, sup_spec],
                out_specs=out_spec,
                scratch_shapes=[pltpu.VMEM((tm, F_out_pad), jnp.float32)],
            ),
            compiler_params=compiler_params_3d,
            cost_estimate=cost2,
        )(adjc, support)
    else:
        bias_p = bias.astype(jnp.float32)
        if F_out_pad != F_out:
            bias_p = jnp.pad(bias_p, ((0, 0), (0, 0), (0, F_out_pad - F_out)))
        bias_spec = pl.BlockSpec(
            (pl.Squeezed(), 1, F_out_pad), lambda b, i, k: (0, 0, 0)
        )
        out_padded = pl.pallas_call(
            _aggregate_bias_kernel,
            out_shape=jax.ShapeDtypeStruct((B, N_pad, F_out_pad), out_dtype),
            grid_spec=pltpu.PrefetchScalarGridSpec(
                num_scalar_prefetch=0,
                grid=(B, N_pad // tm, N_pad // tk),
                in_specs=[adj_spec, sup_spec, bias_spec],
                out_specs=out_spec,
                scratch_shapes=[pltpu.VMEM((tm, F_out_pad), jnp.float32)],
            ),
            compiler_params=compiler_params_3d,
            cost_estimate=cost2,
        )(adjc, support, bias_p)

    return out_padded[:, :N, :F_out]


# ----------------------------------------------------------------------------
# Module mirror (deterministic init like the PyTorch reset_parameters)
# ----------------------------------------------------------------------------
class GraphConvolutionPallas:
    def __init__(self, in_features, out_features, bias=False, key=None):
        self.in_features = in_features
        self.out_features = out_features
        if key is None:
            key = jax.random.PRNGKey(0)
        k_w, k_b = jax.random.split(key)
        stdv = 1.0 / math.sqrt(out_features)
        self.weight = jax.random.uniform(
            k_w, (in_features, out_features), minval=-stdv, maxval=stdv,
            dtype=jnp.float32)
        if bias:
            self.bias = jax.random.uniform(
                k_b, (1, 1, out_features), minval=-stdv, maxval=stdv,
                dtype=jnp.float32)
        else:
            self.bias = None   # matches PyTorch register_parameter('bias', None)

    def __call__(self, x, adj):
        return gcn_forward(x, adj, self.weight, self.bias)


if __name__ == "__main__":
    key = jax.random.PRNGKey(0)
    k_x, k_adj, k_mod = jax.random.split(key, 3)

    B, N, F_in, F_out = 2, 8, 32, 32
    x = jax.random.normal(k_x, (B, N, F_in), dtype=jnp.float32)
    adj = jax.random.uniform(k_adj, (B, N, N), dtype=jnp.float32)

    layer = GraphConvolutionPallas(F_in, F_out, bias=False, key=k_mod)
    out = jax.block_until_ready(layer(x, adj))
    assert out.shape == (B, N, F_out)

    # Reference with the same bf16 input rounding the kernel applies
    # (bf16 operands, f32 accumulation, support stored in bf16).
    xb = x.astype(jnp.bfloat16).astype(jnp.float32)
    wb = layer.weight.astype(jnp.bfloat16).astype(jnp.float32)
    ab = adj.astype(jnp.bfloat16).astype(jnp.float32)
    sup_ref = jnp.matmul(xb, wb).astype(jnp.bfloat16).astype(jnp.float32)
    ref = jnp.matmul(ab, sup_ref).astype(x.dtype)
    assert jnp.allclose(out, ref, atol=2e-3, rtol=2e-3), (
        float(jnp.max(jnp.abs(out - ref))))

    # Also exercise the bias path once.
    layer_b = GraphConvolutionPallas(F_in, F_out, bias=True, key=k_mod)
    out_b = jax.block_until_ready(layer_b(x, adj))
    ref_b = ref + layer_b.bias
    assert jnp.allclose(out_b, ref_b, atol=2e-3, rtol=2e-3)

    print("KERNEL_OK")
</pallas_src>

<mosaic_0001>
module attributes {stable_mosaic.version = 11 : i64} {
  func.func @_support_kernel(%arg0: i32, %arg1: i32, %arg2: memref<1x128x32xbf16, #tpu.memory_space<vmem>>, %arg3: memref<32x128xbf16, #tpu.memory_space<vmem>>, %arg4: memref<1x128x128xbf16, #tpu.memory_space<vmem>>) attributes {dimension_semantics = [#tpu.dimension_semantics<parallel>, #tpu.dimension_semantics<parallel>], iteration_bounds = array<i64: 2, 1>, scalar_prefetch = 0 : i64, scratch_operands = 0 : i64, tpu.core_type = #tpu.core_type<tc>, window_params = [{transform_indices = @transform_0, window_bounds = array<i64: 1, 128, 32>}, {pipeline_mode = #tpu.pipeline_mode<synchronous>, transform_indices = @transform_1, window_bounds = array<i64: 32, 128>}, {transform_indices = @transform_2, window_bounds = array<i64: 1, 128, 128>}]} {
    %c0 = arith.constant 0 : index
    %c0_0 = arith.constant 0 : index
    %c0_1 = arith.constant 0 : index
    %0 = vector.load %arg2[%c0, %c0_0, %c0_1] : memref<1x128x32xbf16, #tpu.memory_space<vmem>>, vector<1x128x32xbf16>
    %1 = vector.shape_cast %0 : vector<1x128x32xbf16> to vector<128x32xbf16>
    %c0_2 = arith.constant 0 : index
    %c0_3 = arith.constant 0 : index
    %2 = vector.load %arg3[%c0_2, %c0_3] : memref<32x128xbf16, #tpu.memory_space<vmem>>, vector<32x128xbf16>
    %cst = arith.constant dense<0.000000e+00> : vector<128x128xf32>
    %3 = tpu.matmul %1, %2, %cst {dimension_numbers = #tpu.dot_dimension_numbers<[1], [0], [0], [1], [0, 0, 1, 1], [], []>} : vector<128x32xbf16>, vector<32x128xbf16>, vector<128x128xf32> -> vector<128x128xf32>
    %4 = arith.truncf %3 : vector<128x128xf32> to vector<128x128xbf16>
    %c0_4 = arith.constant 0 : index
    %c0_5 = arith.constant 0 : index
    %c0_6 = arith.constant 0 : index
    %5 = vector.load %arg4[%c0_4, %c0_5, %c0_6] : memref<1x128x128xbf16, #tpu.memory_space<vmem>>, vector<1x128x128xbf16>
    %6 = vector.shape_cast %5 : vector<1x128x128xbf16> to vector<128x128xbf16>
    %7 = vector.shape_cast %4 : vector<128x128xbf16> to vector<1x128x128xbf16>
    tpu.vector_store %arg4[%c0_4, %c0_5, %c0_6], %7 {strides = array<i32>} : memref<1x128x128xbf16, #tpu.memory_space<vmem>>, vector<1x128x128xbf16>,
    return
  }
  func.func @transform_0(%arg0: i32, %arg1: i32) -> (i32, i32, i32) {
    %c0_i32 = arith.constant 0 : i32
    %c0_i32_0 = arith.constant 0 : i32
    return %arg0, %arg1, %c0_i32 : i32, i32, i32
  }
  func.func @transform_1(%arg0: i32, %arg1: i32) -> (i32, i32) {
    %c0_i32 = arith.constant 0 : i32
    %c0_i32_0 = arith.constant 0 : i32
    %c0_i32_1 = arith.constant 0 : i32
    return %c0_i32, %c0_i32_0 : i32, i32
  }
  func.func @transform_2(%arg0: i32, %arg1: i32) -> (i32, i32, i32) {
    %c0_i32 = arith.constant 0 : i32
    %c0_i32_0 = arith.constant 0 : i32
    return %arg0, %arg1, %c0_i32 : i32, i32, i32
  }
}

module attributes {stable_mosaic.version = 11 : i64} {
  func.func @_aggregate_kernel(%arg0: i32, %arg1: i32, %arg2: i32, %arg3: memref<1x128x128xbf16, #tpu.memory_space<vmem>>, %arg4: memref<1x128x128xbf16, #tpu.memory_space<vmem>>, %arg5: memref<1x128x128xf32, #tpu.memory_space<vmem>>, %arg6: memref<128x128xf32, #tpu.memory_space<vmem>>) attributes {dimension_semantics = [#tpu.dimension_semantics<parallel>, #tpu.dimension_semantics<parallel>, #tpu.dimension_semantics<arbitrary>], iteration_bounds = array<i64: 2, 1, 1>, scalar_prefetch = 0 : i64, scratch_operands = 1 : i64, tpu.core_type = #tpu.core_type<tc>, window_params = [{transform_indices = @transform_0, window_bounds = array<i64: 1, 128, 128>}, {transform_indices = @transform_1, window_bounds = array<i64: 1, 128, 128>}, {transform_indices = @transform_2, window_bounds = array<i64: 1, 128, 128>}]} {
    %c0_i32 = arith.constant 0 : i32
    %0 = arith.cmpi eq, %arg2, %c0_i32 : i32
    %1 = arith.extui %0 : i1 to i32
    %c0_i32_0 = arith.constant 0 : i32
    %2 = arith.cmpi ne, %1, %c0_i32_0 : i32
    scf.if %2 {
      %cst_12 = arith.constant 0.000000e+00 : f32
      %14 = vector.broadcast %cst_12 : f32 to vector<128x128xf32>
      %c0_13 = arith.constant 0 : index
      %c0_14 = arith.constant 0 : index
      %15 = vector.load %arg6[%c0_13, %c0_14] : memref<128x128xf32, #tpu.memory_space<vmem>>, vector<128x128xf32>
      tpu.vector_store %arg6[%c0_13, %c0_14], %14 {strides = array<i32>} : memref<128x128xf32, #tpu.memory_space<vmem>>, vector<128x128xf32>,
    } else {
    }
    %c0 = arith.constant 0 : index
    %c0_1 = arith.constant 0 : index
    %3 = vector.load %arg6[%c0, %c0_1] : memref<128x128xf32, #tpu.memory_space<vmem>>, vector<128x128xf32>
    %c0_2 = arith.constant 0 : index
    %c0_3 = arith.constant 0 : index
    %c0_4 = arith.constant 0 : index
    %4 = vector.load %arg3[%c0_2, %c0_3, %c0_4] : memref<1x128x128xbf16, #tpu.memory_space<vmem>>, vector<1x128x128xbf16>
    %5 = vector.shape_cast %4 : vector<1x128x128xbf16> to vector<128x128xbf16>
    %c0_5 = arith.constant 0 : index
    %c0_6 = arith.constant 0 : index
    %c0_7 = arith.constant 0 : index
    %6 = vector.load %arg4[%c0_5, %c0_6, %c0_7] : memref<1x128x128xbf16, #tpu.memory_space<vmem>>, vector<1x128x128xbf16>
    %7 = vector.shape_cast %6 : vector<1x128x128xbf16> to vector<128x128xbf16>
    %cst = arith.constant dense<0.000000e+00> : vector<128x128xf32>
    %8 = tpu.matmul %5, %7, %cst {dimension_numbers = #tpu.dot_dimension_numbers<[1], [0], [0], [1], [0, 0, 1, 1], [], []>} : vector<128x128xbf16>, vector<128x128xbf16>, vector<128x128xf32> -> vector<128x128xf32>
    %9 = arith.addf %3, %8 : vector<128x128xf32>
    %c0_8 = arith.constant 0 : index
    %c0_9 = arith.constant 0 : index
    %10 = vector.load %arg6[%c0_8, %c0_9] : memref<128x128xf32, #tpu.memory_space<vmem>>, vector<128x128xf32>
    tpu.vector_store %arg6[%c0_8, %c0_9], %9 {strides = array<i32>} : memref<128x128xf32, #tpu.memory_space<vmem>>, vector<128x128xf32>,
    %c0_i32_10 = arith.constant 0 : i32
    %11 = arith.cmpi eq, %arg2, %c0_i32_10 : i32
    %12 = arith.extui %11 : i1 to i32
    %c0_i32_11 = arith.constant 0 : i32
    %13 = arith.cmpi ne, %12, %c0_i32_11 : i32
    scf.if %13 {
      %c0_12 = arith.constant 0 : index
      %c0_13 = arith.constant 0 : index
      %14 = vector.load %arg6[%c0_12, %c0_13] : memref<128x128xf32, #tpu.memory_space<vmem>>, vector<128x128xf32>
      %c0_14 = arith.constant 0 : index
      %c0_15 = arith.constant 0 : index
      %c0_16 = arith.constant 0 : index
      %15 = vector.load %arg5[%c0_14, %c0_15, %c0_16] : memref<1x128x128xf32, #tpu.memory_space<vmem>>, vector<1x128x128xf32>
      %16 = vector.shape_cast %15 : vector<1x128x128xf32> to vector<128x128xf32>
      %17 = vector.shape_cast %14 : vector<128x128xf32> to vector<1x128x128xf32>
      tpu.vector_store %arg5[%c0_14, %c0_15, %c0_16], %17 {strides = array<i32>} : memref<1x128x128xf32, #tpu.memory_space<vmem>>, vector<1x128x128xf32>,
    } else {
    }
    return
  }
  func.func @transform_0(%arg0: i32, %arg1: i32, %arg2: i32) -> (i32, i32, i32) {
    %c0_i32 = arith.constant 0 : i32
    return %arg0, %arg1, %arg2 : i32, i32, i32
  }
  func.func @transform_1(%arg0: i32, %arg1: i32, %arg2: i32) -> (i32, i32, i32) {
    %c0_i32 = arith.constant 0 : i32
    %c0_i32_0 = arith.constant 0 : i32
    return %arg0, %arg2, %c0_i32 : i32, i32, i32
  }
  func.func @transform_2(%arg0: i32, %arg1: i32, %arg2: i32) -> (i32, i32, i32) {
    %c0_i32 = arith.constant 0 : i32
    %c0_i32_0 = arith.constant 0 : i32
    return %arg0, %arg1, %c0_i32 : i32, i32, i32
  }
}

</mosaic_0001>

<llo_original>
// kernel: gcn_forward.2
$region0: #{gcn_forward.2}
  #allocation0 [shape = 'u32[]', space=smem, size = 0x4, offset = 0x4, fixed_abs, tag = 'smem constant byte address 0x4 - core index']
  #allocation1 [shape = 'u32[144,128]{1,0:T(1,128)}', space=vmem, size = 0x12000, scoped, tag = 'internal scratch']
  %s0 = inlined_call_operand.vmem [shape: bf16[2,128,32], index: 0, kind: input, shape index: {}]
  %s1 = inlined_call_operand.vmem [shape: bf16[32,128], index: 1, kind: input, shape index: {}]
  %s2 = inlined_call_operand.vmem [shape: bf16[2,128,128], index: 2, kind: output, shape index: {}]
  %s3 = sld [smem:[#allocation0]]
  $region41: #{gcn_forward.2} parent=0
    _
  %s5 = ssub.s32 1, %s3
  %s6 = scalar_select 0, %s5, %s3
  loop: start=0, step=1, limit=4
  $region2: #{gcn_forward.2} parent=0 // loop_pre_header
    _
  $region3: #{gcn_forward.2} parent=0 // loop_header
    %s8 = sphi 0, %s12
    %p9 = scmp.ge.s32.totalorder %s8, 4
    %s15 = sphi 0, %s27
    %s16 = sphi 0, %s23
    %s17 = sphi 0, %s15
    %s18 = sphi 0, %s16
    %s19 = sphi 0, %s17
    %s20 = sphi 0, %s18
    %s32 = sphi 0, %s34
    %s35 = sphi 0, %s32
    %s36 = sphi 0, %s35
    %s52 = sphi 0, %s36
    %s56 = sphi 0, %s56
    %s58 = sphi 0, %s56
    %s59 = sphi 0, %s58
    %s73 = sphi 0, %s59
    %s81 = sphi 0, %s83
    %s84 = sphi 0, %s81
    %s85 = sphi 0, %s84
    %s101 = sphi 0, %s85
  $region4: #{gcn_forward.2} parent=0 // loop_header_branch
    %11 = sbr.rel (%p9) target = $region8
  $region5: #{gcn_forward.2} parent=0 // loop_body
    %s13 = ssub.s32 %s8, 1
    %s14 = ssub.s32 %s8, 2
    %s21 = sadd.s32 1, %s16
    %p22 = scmp.ge.s32.totalorder %s21, 1
    %s23 = scalar_select %p22, 0, %s21
    %s24 = sadd.s32 1, %s15
    %s25 = scalar_select %p22, %s24, %s15
    %p26 = scmp.ge.s32.totalorder %s25, 2
    %s27 = scalar_select %p26, 0, %s25
    %s28 = ssub.s32 %s15, %s27
    %s29 = ssub.s32 %s16, %s23
    %s30 = sor.u32 %s28, %s29
    %p31 = scmp.eq.s32.totalorder %s30, 0
    %s33 = sadd.s32 %s32, 1
    %s34 = scalar_select %p31, %s32, %s33
    %p37 = pneg %p31
    %p38 = scmp.eq.s32.totalorder %s8, 1
    %p39 = por %p37, %p38
    %p40 = scmp.ne.s32.totalorder %s32, %s35
    %p41 = scmp.eq.s32.totalorder %s8, 0
    %p42 = por %p40, %p41
    %p43 = scmp.ne.s32.totalorder %s32, %s35
    %p44 = scmp.eq.s32.totalorder %s13, 1
    %p45 = por %p43, %p44
    %p46 = scmp.ne.s32.totalorder %s35, %s36
    %p47 = scmp.eq.s32.totalorder %s13, 0
    %p48 = por %p46, %p47
    %p49 = scmp.ne.s32.totalorder %s35, %s36
    %p50 = scmp.eq.s32.totalorder %s14, 1
    %p51 = por %p49, %p50
    %p53 = scmp.ne.s32.totalorder %s36, %s52
    %p54 = scmp.eq.s32.totalorder %s14, 0
    %p55 = por %p53, %p54
    %s57 = sadd.s32 %s56, 1
    %p60 = scmp.eq.s32.totalorder %s8, 1
    %p61 = scmp.ne.s32.totalorder %s56, %s58
    %p62 = scmp.eq.s32.totalorder %s8, 0
    %p63 = por %p61, %p62
    %p64 = scmp.ne.s32.totalorder %s56, %s58
    %p65 = scmp.eq.s32.totalorder %s13, 1
    %p66 = por %p64, %p65
    %p67 = scmp.ne.s32.totalorder %s58, %s59
    %p68 = scmp.eq.s32.totalorder %s13, 0
    %p69 = por %p67, %p68
    %p70 = scmp.ne.s32.totalorder %s58, %s59
    %p71 = scmp.eq.s32.totalorder %s14, 1
    %p72 = por %p70, %p71
    %p74 = scmp.ne.s32.totalorder %s59, %s73
    %p75 = scmp.eq.s32.totalorder %s14, 0
    %p76 = por %p74, %p75
    %s77 = ssub.s32 %s15, %s27
    %s78 = ssub.s32 %s16, %s23
    %s79 = sor.u32 %s77, %s78
    %p80 = scmp.eq.s32.totalorder %s79, 0
    %s82 = sadd.s32 %s81, 1
    %s83 = scalar_select %p80, %s81, %s82
    %p86 = pneg %p80
    %p87 = scmp.eq.s32.totalorder %s8, 1
    %p88 = por %p86, %p87
    %p89 = scmp.ne.s32.totalorder %s81, %s84
    %p90 = scmp.eq.s32.totalorder %s8, 0
    %p91 = por %p89, %p90
    %p92 = scmp.ne.s32.totalorder %s81, %s84
    %p93 = scmp.eq.s32.totalorder %s13, 1
    %p94 = por %p92, %p93
    %p95 = scmp.ne.s32.totalorder %s84, %s85
    %p96 = scmp.eq.s32.totalorder %s13, 0
    %p97 = por %p95, %p96
    %p98 = scmp.ne.s32.totalorder %s84, %s85
    %p99 = scmp.eq.s32.totalorder %s14, 1
    %p100 = por %p98, %p99
    %p102 = scmp.ne.s32.totalorder %s85, %s101
    %p103 = scmp.eq.s32.totalorder %s14, 0
    %p104 = por %p102, %p103
    %p105 = scmp.le.s32.totalorder 1, %s8
    %p106 = scmp.lt.s32.totalorder %s8, 3
    %p107 = pnand %p105, %p106
    %p108 = pneg %p107
    // Predicated region
    $region9: #{gcn_forward.2} parent=5 // pred_check
      _
    $region10: #{gcn_forward.2} parent=5 // pred_check_branch
      %110 = sbr.rel (%p107) target = $region12
    $region11: #{gcn_forward.2} parent=5 // pred_region
      %s111 = ssub.s32 %s8, 1
      // Predicated region
      $region13: #{gcn_forward.2} parent=11 // pred_check
        %p112 = pneg %p69
      $region14: #{gcn_forward.2} parent=11 // pred_check_branch
        %114 = sbr.rel (%p112) target = $region16
      $region15: #{gcn_forward.2} parent=11 // pred_region
        _
      $region16: #{gcn_forward.2} parent=11 // pred_fallthru
        _
    $region12: #{gcn_forward.2} parent=5 // pred_fallthru
      _
    %p115 = scmp.lt.s32.totalorder %s8, 2
    // Predicated region
    $region17: #{gcn_forward.2} parent=5 // pred_check
      %p116 = pneg %p115
    $region18: #{gcn_forward.2} parent=5 // pred_check_branch
      %118 = sbr.rel (%p116) target = $region20
    $region19: #{gcn_forward.2} parent=5 // pred_region
      // Predicated region
      $region21: #{gcn_forward.2} parent=19 // pred_check
        %p119 = pneg %p42
      $region22: #{gcn_forward.2} parent=19 // pred_check_branch
        %121 = sbr.rel (%p119) target = $region24
      $region23: #{gcn_forward.2} parent=19 // pred_region
        %s122 = smul.u32 16, %s16
        %p123 = scmp.lt.s32.totalorder %s15, 1
        %s124 = scalar_select %p123, %s15, 1
        %p125 = scmp.lt.s32.totalorder %s122, 15
        %s126 = scalar_select %p125, %s122, 15
        %s127 = smul.addr %s124, 16
        %s128 = sadd.s32 %s126, %s127
        %s129 = smul.addr %s128, 4
        %s130 = scalar_lea.vmem %s0, %s129
        %s131 = smul.u32 16, %s16
      $region24: #{gcn_forward.2} parent=19 // pred_fallthru
        _
    $region20: #{gcn_forward.2} parent=5 // pred_fallthru
      _
    %p132 = scmp.le.s32.totalorder 1, %s8
    %p133 = scmp.lt.s32.totalorder %s8, 3
    %p134 = pnand %p132, %p133
    %p135 = pneg %p134
    // Predicated region
    $region25: #{gcn_forward.2} parent=5 // pred_check
      _
    $region26: #{gcn_forward.2} parent=5 // pred_check_branch
      %137 = sbr.rel (%p134) target = $region28
    $region27: #{gcn_forward.2} parent=5 // pred_region
      %s138 = ssub.s32 %s8, 1
      %s139 = smul.u32 16, %s18
      %p140 = scmp.lt.s32.totalorder %s17, 1
      %s141 = scalar_select %p140, %s17, 1
      %p142 = scmp.lt.s32.totalorder %s139, 15
      %s143 = scalar_select %p142, %s139, 15
      %s144 = smul.addr %s141, 16
      %s145 = sadd.s32 %s143, %s144
      %s146 = smul.addr %s145, 4
      %s147 = scalar_lea.vmem %s0, %s146
      %p148 = pneg %p48
      %p149 = pneg %p45
      %p150 = pneg %p69
      %p151 = pneg %p66
      %p152 = pneg %p97
      %p153 = pneg %p94
      %s154 = smul.u32 16, %s18
      %p155 = scmp.lt.s32.totalorder %s17, 1
      %s156 = scalar_select %p155, %s17, 1
      %p157 = scmp.lt.s32.totalorder %s154, 15
      %s158 = scalar_select %p157, %s154, 15
      %s159 = smul.addr %s156, 16
      %s160 = sadd.s32 %s158, %s159
      %s161 = smul.addr %s160, 4
      %s162 = scalar_lea.vmem %s2, %s161
      %s163 = smul.u32 16, %s18
      %p164 = scmp.lt.s32.totalorder %s17, 1
      %s165 = scalar_select %p164, %s17, 1
      %p166 = scmp.lt.s32.totalorder %s163, 15
      %s167 = scalar_select %p166, %s163, 15
      %s168 = smul.addr %s165, 16
      %s169 = sadd.s32 %s167, %s168
      %s170 = smul.addr %s169, 4
      %s171 = scalar_lea.vmem %s0, %s170
      %s172 = smul.u32 16, %s18
      %s173 = smul.u32 16, %s18
      %p174 = scmp.lt.s32.totalorder %s17, 1
      %s175 = scalar_select %p174, %s17, 1
      %p176 = scmp.lt.s32.totalorder %s173, 15
      %s177 = scalar_select %p176, %s173, 15
      %s178 = smul.addr %s175, 16
      %s179 = sadd.s32 %s177, %s178
      %s180 = smul.addr %s179, 4
      %s181 = scalar_lea.vmem %s2, %s180
      %s182 = smul.u32 16, %s18
      %v184 = vld [vmem:[%s171] sm:$0xf]
      %v185 = vld [vmem:[%s171 + $0x4] sm:$0xf]
      %v186 = vld [vmem:[%s171 + $0x8] sm:$0xf]
      %v187 = vld [vmem:[%s171 + $0xc] sm:$0xf]
      %v188 = vld [vmem:[%s171 + $0x10] sm:$0xf]
      %v189 = vld [vmem:[%s171 + $0x14] sm:$0xf]
      %v190 = vld [vmem:[%s171 + $0x18] sm:$0xf]
      %v191 = vld [vmem:[%s171 + $0x1c] sm:$0xf]
      %v192 = vld [vmem:[%s171 + $0x20] sm:$0xf]
      %v193 = vld [vmem:[%s171 + $0x24] sm:$0xf]
      %v194 = vld [vmem:[%s171 + $0x28] sm:$0xf]
      %v195 = vld [vmem:[%s171 + $0x2c] sm:$0xf]
      %v196 = vld [vmem:[%s171 + $0x30] sm:$0xf]
      %v197 = vld [vmem:[%s171 + $0x34] sm:$0xf]
      %v198 = vld [vmem:[%s171 + $0x38] sm:$0xf]
      %v199 = vld [vmem:[%s171 + $0x3c] sm:$0xf]
      %v200 = vld [vmem:[%s1] sm:$0xf]
      %v201 = vld [vmem:[%s1 + $0x4] sm:$0xf]
      %v202 = vld [vmem:[%s1 + $0x8] sm:$0xf]
      %v203 = vld [vmem:[%s1 + $0xc] sm:$0xf]
      %v220 = vunpack.c.l.b16 %v184
      %v221 = vunpack.c.l.b16 %v185
      %v222 = vunpack.c.l.b16 %v186
      %v223 = vunpack.c.l.b16 %v187
      %v224 = vunpack.c.l.b16 %v188
      %v225 = vunpack.c.l.b16 %v189
      %v226 = vunpack.c.l.b16 %v190
      %v227 = vunpack.c.l.b16 %v191
      %v228 = vunpack.c.l.b16 %v192
      %v229 = vunpack.c.l.b16 %v193
      %v230 = vunpack.c.l.b16 %v194
      %v231 = vunpack.c.l.b16 %v195
      %v232 = vunpack.c.l.b16 %v196
      %v233 = vunpack.c.l.b16 %v197
      %v234 = vunpack.c.l.b16 %v198
      %v235 = vunpack.c.l.b16 %v199
      %v236 = vpack.c.b16 %v221, %v220
      %v237 = vpack.c.b16 %v223, %v222
      %v238 = vpack.c.b16 %v225, %v224
      %v239 = vpack.c.b16 %v227, %v226
      %v240 = vpack.c.b16 %v229, %v228
      %v241 = vpack.c.b16 %v231, %v230
      %v242 = vpack.c.b16 %v233, %v232
      %v243 = vpack.c.b16 %v235, %v234
      %v248 = vunpack.c.l.b16 %v200
      %v249 = vunpack.c.l.b16 %v201
      %v250 = vunpack.c.l.b16 %v202
      %v251 = vunpack.c.l.b16 %v203
      %v252 = vpack.c.b16 %v249, %v248
      %v253 = vpack.c.b16 %v251, %v250
      %vm256 = vcmask 261120
      %v258 = vsel %vm256, %v236, 0
      %v261 = vsel %vm256, %v237, 0
      %v264 = vsel %vm256, %v238, 0
      %v267 = vsel %vm256, %v239, 0
      %v270 = vsel %vm256, %v240, 0
      %v273 = vsel %vm256, %v241, 0
      %v276 = vsel %vm256, %v242, 0
      %v279 = vsel %vm256, %v243, 0
      %281 = vmatprep.subr.bf16.mxu0 0
      %282 = vmatpush1.bf16.msra.mxu0 %v252
      %283 = vmatprep.subr.bf16.mxu0 0
      %284 = vmatpush1.bf16.msra.mxu0 %v253
      %285 = vmatprep.subr.bf16.mxu0 0
      %286 = vmatpush1.bf16.msra.mxu0 0
      %287 = vmatprep.subr.bf16.mxu0 0
      %288 = vmatpush1.bf16.msra.mxu0 0
      %289 = vmatprep.subr.bf16.mxu0 0
      %290 = vmatpush1.bf16.msra.mxu0 0
      %291 = vmatprep.subr.bf16.mxu0 0
      %292 = vmatpush1.bf16.msra.mxu0 0
      %293 = vmatprep.subr.bf16.mxu0 0
      %294 = vmatpush1.bf16.msra.mxu0 0
      %295 = vmatprep.subr.bf16.mxu0 0
      %296 = vmatpush1.bf16.msra.mxu0 0
      %297 = vmatprep.subr.bf16.mxu0 0
      %298 = vmatpush1.bf16.msra.mxu0 0
      %299 = vmatprep.subr.bf16.mxu0 0
      %300 = vmatpush1.bf16.msra.mxu0 0
      %301 = vmatprep.subr.bf16.mxu0 0
      %302 = vmatpush1.bf16.msra.mxu0 0
      %303 = vmatprep.subr.bf16.mxu0 0
      %304 = vmatpush1.bf16.msra.mxu0 0
      %305 = vmatprep.subr.bf16.mxu0 0
      %306 = vmatpush1.bf16.msra.mxu0 0
      %307 = vmatprep.subr.bf16.mxu0 0
      %308 = vmatpush1.bf16.msra.mxu0 0
      %309 = vmatprep.subr.bf16.mxu0 0
      %310 = vmatpush1.bf16.msra.mxu0 0
      %311 = vmatprep.subr.bf16.mxu0 0
      %312 = vmatpush1.bf16.msra.mxu0 0
      %313 = vmatprep.mubr.bf16.mxu0 0
      %314 = vmatmul.mubr.bf16.gmra.mrb[0].mxu0 %v258
      %v315 = vpop.f32.mrb[0].mxu0
      %v316 = vadd.f32 0.0, %v315
      %v317 = vpop.f32.mrb[0].mxu0
      %v318 = vpop.f32.mrb[0].mxu0
      %v319 = vadd.f32 0.0, %v318
      %v320 = vpop.f32.mrb[0].mxu0
      %321 = vmatprep.mubr.bf16.mxu0 0
      %322 = vmatmul.mubr.bf16.gmra.mrb[0].mxu0 %v261
      %v323 = vpop.f32.mrb[0].mxu0
      %v324 = vadd.f32 0.0, %v323
      %v325 = vpop.f32.mrb[0].mxu0
      %v326 = vpop.f32.mrb[0].mxu0
      %v327 = vadd.f32 0.0, %v326
      %v328 = vpop.f32.mrb[0].mxu0
      %329 = vmatprep.mubr.bf16.mxu0 0
      %330 = vmatmul.mubr.bf16.gmra.mrb[0].mxu0 %v264
      %v331 = vpop.f32.mrb[0].mxu0
      %v332 = vadd.f32 0.0, %v331
      %v333 = vpop.f32.mrb[0].mxu0
      %v334 = vpop.f32.mrb[0].mxu0
      %v335 = vadd.f32 0.0, %v334
      %v336 = vpop.f32.mrb[0].mxu0
      %337 = vmatprep.mubr.bf16.mxu0 0
      %338 = vmatmul.mubr.bf16.gmra.mrb[0].mxu0 %v267
      %v339 = vpop.f32.mrb[0].mxu0
      %v340 = vadd.f32 0.0, %v339
      %v341 = vpop.f32.mrb[0].mxu0
      %v342 = vpop.f32.mrb[0].mxu0
      %v343 = vadd.f32 0.0, %v342
      %v344 = vpop.f32.mrb[0].mxu0
      %345 = vmatprep.mubr.bf16.mxu0 0
      %346 = vmatmul.mubr.bf16.gmra.mrb[0].mxu0 %v270
      %v347 = vpop.f32.mrb[0].mxu0
      %v348 = vadd.f32 0.0, %v347
      %v349 = vpop.f32.mrb[0].mxu0
      %v350 = vpop.f32.mrb[0].mxu0
      %v351 = vadd.f32 0.0, %v350
      %v352 = vpop.f32.mrb[0].mxu0
      %353 = vmatprep.mubr.bf16.mxu0 0
      %354 = vmatmul.mubr.bf16.gmra.mrb[0].mxu0 %v273
      %v355 = vpop.f32.mrb[0].mxu0
      %v356 = vadd.f32 0.0, %v355
      %v357 = vpop.f32.mrb[0].mxu0
      %v358 = vpop.f32.mrb[0].mxu0
      %v359 = vadd.f32 0.0, %v358
      %v360 = vpop.f32.mrb[0].mxu0
      %361 = vmatprep.mubr.bf16.mxu0 0
      %362 = vmatmul.mubr.bf16.gmra.mrb[0].mxu0 %v276
      %v363 = vpop.f32.mrb[0].mxu0
      %v364 = vadd.f32 0.0, %v363
      %v365 = vpop.f32.mrb[0].mxu0
      %v366 = vpop.f32.mrb[0].mxu0
      %v367 = vadd.f32 0.0, %v366
      %v368 = vpop.f32.mrb[0].mxu0
      %369 = vmatprep.mubr.bf16.mxu0 0
      %370 = vmatmul.mubr.bf16.gmra.mrb[0].mxu0 %v279
      %v371 = vpop.f32.mrb[0].mxu0
      %v372 = vadd.f32 0.0, %v371
      %v373 = vpop.f32.mrb[0].mxu0
      %v374 = vpop.f32.mrb[0].mxu0
      %v375 = vadd.f32 0.0, %v374
      %v376 = vpop.f32.mrb[0].mxu0
      %377 = vdwg.mxu0
      %v378 = vpack.c.bf16 %v319, %v316
      %v379 = vpack.c.bf16 %v327, %v324
      %v380 = vpack.c.bf16 %v335, %v332
      %v381 = vpack.c.bf16 %v343, %v340
      %v382 = vpack.c.bf16 %v351, %v348
      %v383 = vpack.c.bf16 %v359, %v356
      %v384 = vpack.c.bf16 %v367, %v364
      %v385 = vpack.c.bf16 %v375, %v372
      %v394 = vunpack.c.l.b16 %v378
      %v395 = vunpack.c.h.b16 %v378
      %v396 = vunpack.c.l.b16 %v379
      %v397 = vunpack.c.h.b16 %v379
      %v398 = vunpack.c.l.b16 %v380
      %v399 = vunpack.c.h.b16 %v380
      %v400 = vunpack.c.l.b16 %v381
      %v401 = vunpack.c.h.b16 %v381
      %v402 = vunpack.c.l.b16 %v382
      %v403 = vunpack.c.h.b16 %v382
      %v404 = vunpack.c.l.b16 %v383
      %v405 = vunpack.c.h.b16 %v383
      %v406 = vunpack.c.l.b16 %v384
      %v407 = vunpack.c.h.b16 %v384
      %v408 = vunpack.c.l.b16 %v385
      %v409 = vunpack.c.h.b16 %v385
      %v410 = vpack.c.b16 %v394, %v394
      %v411 = vpack.c.b16 %v395, %v395
      %v412 = vpack.c.b16 %v396, %v396
      %v413 = vpack.c.b16 %v397, %v397
      %v414 = vpack.c.b16 %v398, %v398
      %v415 = vpack.c.b16 %v399, %v399
      %v416 = vpack.c.b16 %v400, %v400
      %v417 = vpack.c.b16 %v401, %v401
      %v418 = vpack.c.b16 %v402, %v402
      %v419 = vpack.c.b16 %v403, %v403
      %v420 = vpack.c.b16 %v404, %v404
      %v421 = vpack.c.b16 %v405, %v405
      %v422 = vpack.c.b16 %v406, %v406
      %v423 = vpack.c.b16 %v407, %v407
      %v424 = vpack.c.b16 %v408, %v408
      %v425 = vpack.c.b16 %v409, %v409
      %442 = vst [vmem:[%s181] sm:$0xf] %v410
      %443 = vst [vmem:[%s181 + $0x4] sm:$0xf] %v411
      %444 = vst [vmem:[%s181 + $0x8] sm:$0xf] %v412
      %445 = vst [vmem:[%s181 + $0xc] sm:$0xf] %v413
      %446 = vst [vmem:[%s181 + $0x10] sm:$0xf] %v414
      %447 = vst [vmem:[%s181 + $0x14] sm:$0xf] %v415
      %448 = vst [vmem:[%s181 + $0x18] sm:$0xf] %v416
      %449 = vst [vmem:[%s181 + $0x1c] sm:$0xf] %v417
      %450 = vst [vmem:[%s181 + $0x20] sm:$0xf] %v418
      %451 = vst [vmem:[%s181 + $0x24] sm:$0xf] %v419
      %452 = vst [vmem:[%s181 + $0x28] sm:$0xf] %v420
      %453 = vst [vmem:[%s181 + $0x2c] sm:$0xf] %v421
      %454 = vst [vmem:[%s181 + $0x30] sm:$0xf] %v422
      %455 = vst [vmem:[%s181 + $0x34] sm:$0xf] %v423
      %456 = vst [vmem:[%s181 + $0x38] sm:$0xf] %v424
      %457 = vst [vmem:[%s181 + $0x3c] sm:$0xf] %v425
      %s458 = smul.u32 16, %s18
      %p459 = scmp.lt.s32.totalorder %s17, 1
      %s460 = scalar_select %p459, %s17, 1
      %p461 = scmp.lt.s32.totalorder %s458, 15
      %s462 = scalar_select %p461, %s458, 15
      %s463 = smul.addr %s460, 16
      %s464 = sadd.s32 %s462, %s463
      %s465 = smul.addr %s464, 4
      %s466 = scalar_lea.vmem %s2, %s465
      // Predicated region
      $region29: #{gcn_forward.2} parent=27 // pred_check
        %p467 = pneg %p94
      $region30: #{gcn_forward.2} parent=27 // pred_check_branch
        %469 = sbr.rel (%p467) target = $region32
      $region31: #{gcn_forward.2} parent=27 // pred_region
        %s470 = smul.u32 16, %s18
      $region32: #{gcn_forward.2} parent=27 // pred_fallthru
        _
    $region28: #{gcn_forward.2} parent=5 // pred_fallthru
      _
    %p471 = scmp.le.s32.totalorder 2, %s8
    // Predicated region
    $region33: #{gcn_forward.2} parent=5 // pred_check
      %p472 = pneg %p471
    $region34: #{gcn_forward.2} parent=5 // pred_check_branch
      %474 = sbr.rel (%p472) target = $region36
    $region35: #{gcn_forward.2} parent=5 // pred_region
      %s475 = ssub.s32 %s8, 2
      // Predicated region
      $region37: #{gcn_forward.2} parent=35 // pred_check
        %p476 = pneg %p100
      $region38: #{gcn_forward.2} parent=35 // pred_check_branch
        %478 = sbr.rel (%p476) target = $region40
      $region39: #{gcn_forward.2} parent=35 // pred_region
        %s479 = smul.u32 16, %s20
        %p480 = scmp.lt.s32.totalorder %s19, 1
        %s481 = scalar_select %p480, %s19, 1
        %p482 = scmp.lt.s32.totalorder %s479, 15
        %s483 = scalar_select %p482, %s479, 15
        %s484 = smul.addr %s481, 16
        %s485 = sadd.s32 %s483, %s484
        %s486 = smul.addr %s485, 4
        %s487 = scalar_lea.vmem %s2, %s486
      $region40: #{gcn_forward.2} parent=35 // pred_fallthru
        _
    $region36: #{gcn_forward.2} parent=5 // pred_fallthru
      _
  $region6: #{gcn_forward.2} parent=0 // loop_footer
    %s12 = sadd.s32 1, %s8
  $region7: #{gcn_forward.2} parent=0 // loop_footer_branch
    %7 = sbr.rel target = $region3
  $region8: #{gcn_forward.2} parent=0 // loop_exit
    _

// kernel: gcn_forward.3
$region0: #{gcn_forward.3}
  #allocation0 [shape = 'u32[]', space=smem, size = 0x4, offset = 0x4, fixed_abs, tag = 'smem constant byte address 0x4 - core index']
  #allocation1 [shape = 'u32[144,128]{1,0:T(1,128)}', space=vmem, size = 0x12000, scoped, tag = 'internal scratch']
  #allocation2 [shape = 'f32[128,128]{1,0:T(8,128)}', space=vmem, size = 0x10000, scoped, tag = 'scratch operand']
  %s0 = inlined_call_operand.vmem [shape: bf16[2,128,128], index: 0, kind: input, shape index: {}]
  %s1 = inlined_call_operand.vmem [shape: bf16[2,128,128], index: 1, kind: input, shape index: {}]
  %s2 = inlined_call_operand.vmem [shape: f32[2,128,128], index: 2, kind: output, shape index: {}]
  %s3 = sld [smem:[#allocation0]]
  $region49: #{gcn_forward.3} parent=0
    _
  %s5 = ssub.s32 1, %s3
  %s6 = scalar_select 0, %s5, %s3
  loop: start=0, step=1, limit=4
  $region2: #{gcn_forward.3} parent=0 // loop_pre_header
    _
  $region3: #{gcn_forward.3} parent=0 // loop_header
    %s8 = sphi 0, %s12
    %p9 = scmp.ge.s32.totalorder %s8, 4
    %s15 = sphi 0, %s34
    %s16 = sphi 0, %s30
    %s17 = sphi 0, %s26
    %s18 = sphi 0, %s15
    %s19 = sphi 0, %s16
    %s20 = sphi 0, %s17
    %s21 = sphi 0, %s18
    %s22 = sphi 0, %s19
    %s23 = sphi 0, %s20
    %s41 = sphi 0, %s43
    %s44 = sphi 0, %s41
    %s45 = sphi 0, %s44
    %s61 = sphi 0, %s45
    %s69 = sphi 0, %s71
    %s72 = sphi 0, %s69
    %s73 = sphi 0, %s72
    %s89 = sphi 0, %s73
    %s97 = sphi 0, %s99
    %s100 = sphi 0, %s97
    %s101 = sphi 0, %s100
    %s117 = sphi 0, %s101
  $region4: #{gcn_forward.3} parent=0 // loop_header_branch
    %11 = sbr.rel (%p9) target = $region8
  $region5: #{gcn_forward.3} parent=0 // loop_body
    %s13 = ssub.s32 %s8, 1
    %s14 = ssub.s32 %s8, 2
    %s24 = sadd.s32 1, %s17
    %p25 = scmp.ge.s32.totalorder %s24, 1
    %s26 = scalar_select %p25, 0, %s24
    %s27 = sadd.s32 1, %s16
    %s28 = scalar_select %p25, %s27, %s16
    %p29 = scmp.ge.s32.totalorder %s28, 1
    %s30 = scalar_select %p29, 0, %s28
    %s31 = sadd.s32 1, %s15
    %s32 = scalar_select %p29, %s31, %s15
    %p33 = scmp.ge.s32.totalorder %s32, 2
    %s34 = scalar_select %p33, 0, %s32
    %s35 = ssub.s32 %s15, %s34
    %s36 = ssub.s32 %s16, %s30
    %s37 = sor.u32 %s35, %s36
    %s38 = ssub.s32 %s17, %s26
    %s39 = sor.u32 %s37, %s38
    %p40 = scmp.eq.s32.totalorder %s39, 0
    %s42 = sadd.s32 %s41, 1
    %s43 = scalar_select %p40, %s41, %s42
    %p46 = pneg %p40
    %p47 = scmp.eq.s32.totalorder %s8, 1
    %p48 = por %p46, %p47
    %p49 = scmp.ne.s32.totalorder %s41, %s44
    %p50 = scmp.eq.s32.totalorder %s8, 0
    %p51 = por %p49, %p50
    %p52 = scmp.ne.s32.totalorder %s41, %s44
    %p53 = scmp.eq.s32.totalorder %s13, 1
    %p54 = por %p52, %p53
    %p55 = scmp.ne.s32.totalorder %s44, %s45
    %p56 = scmp.eq.s32.totalorder %s13, 0
    %p57 = por %p55, %p56
    %p58 = scmp.ne.s32.totalorder %s44, %s45
    %p59 = scmp.eq.s32.totalorder %s14, 1
    %p60 = por %p58, %p59
    %p62 = scmp.ne.s32.totalorder %s45, %s61
    %p63 = scmp.eq.s32.totalorder %s14, 0
    %p64 = por %p62, %p63
    %s65 = ssub.s32 %s15, %s34
    %s66 = ssub.s32 %s17, %s26
    %s67 = sor.u32 %s65, %s66
    %p68 = scmp.eq.s32.totalorder %s67, 0
    %s70 = sadd.s32 %s69, 1
    %s71 = scalar_select %p68, %s69, %s70
    %p74 = pneg %p68
    %p75 = scmp.eq.s32.totalorder %s8, 1
    %p76 = por %p74, %p75
    %p77 = scmp.ne.s32.totalorder %s69, %s72
    %p78 = scmp.eq.s32.totalorder %s8, 0
    %p79 = por %p77, %p78
    %p80 = scmp.ne.s32.totalorder %s69, %s72
    %p81 = scmp.eq.s32.totalorder %s13, 1
    %p82 = por %p80, %p81
    %p83 = scmp.ne.s32.totalorder %s72, %s73
    %p84 = scmp.eq.s32.totalorder %s13, 0
    %p85 = por %p83, %p84
    %p86 = scmp.ne.s32.totalorder %s72, %s73
    %p87 = scmp.eq.s32.totalorder %s14, 1
    %p88 = por %p86, %p87
    %p90 = scmp.ne.s32.totalorder %s73, %s89
    %p91 = scmp.eq.s32.totalorder %s14, 0
    %p92 = por %p90, %p91
    %s93 = ssub.s32 %s15, %s34
    %s94 = ssub.s32 %s16, %s30
    %s95 = sor.u32 %s93, %s94
    %p96 = scmp.eq.s32.totalorder %s95, 0
    %s98 = sadd.s32 %s97, 1
    %s99 = scalar_select %p96, %s97, %s98
    %p102 = pneg %p96
    %p103 = scmp.eq.s32.totalorder %s8, 1
    %p104 = por %p102, %p103
    %p105 = scmp.ne.s32.totalorder %s97, %s100
    %p106 = scmp.eq.s32.totalorder %s8, 0
    %p107 = por %p105, %p106
    %p108 = scmp.ne.s32.totalorder %s97, %s100
    %p109 = scmp.eq.s32.totalorder %s13, 1
    %p110 = por %p108, %p109
    %p111 = scmp.ne.s32.totalorder %s100, %s101
    %p112 = scmp.eq.s32.totalorder %s13, 0
    %p113 = por %p111, %p112
    %p114 = scmp.ne.s32.totalorder %s100, %s101
    %p115 = scmp.eq.s32.totalorder %s14, 1
    %p116 = por %p114, %p115
    %p118 = scmp.ne.s32.totalorder %s101, %s117
    %p119 = scmp.eq.s32.totalorder %s14, 0
    %p120 = por %p118, %p119
    %p121 = scmp.le.s32.totalorder 1, %s8
    %p122 = scmp.lt.s32.totalorder %s8, 3
    %p123 = pnand %p121, %p122
    %p124 = pneg %p123
    // Predicated region
    $region9: #{gcn_forward.3} parent=5 // pred_check
      _
    $region10: #{gcn_forward.3} parent=5 // pred_check_branch
      %126 = sbr.rel (%p123) target = $region12
    $region11: #{gcn_forward.3} parent=5 // pred_region
      %s127 = ssub.s32 %s8, 1
    $region12: #{gcn_forward.3} parent=5 // pred_fallthru
      _
    %p128 = scmp.lt.s32.totalorder %s8, 2
    // Predicated region
    $region13: #{gcn_forward.3} parent=5 // pred_check
      %p129 = pneg %p128
    $region14: #{gcn_forward.3} parent=5 // pred_check_branch
      %131 = sbr.rel (%p129) target = $region16
    $region15: #{gcn_forward.3} parent=5 // pred_region
      // Predicated region
      $region17: #{gcn_forward.3} parent=15 // pred_check
        %p132 = pneg %p51
      $region18: #{gcn_forward.3} parent=15 // pred_check_branch
        %134 = sbr.rel (%p132) target = $region20
      $region19: #{gcn_forward.3} parent=15 // pred_region
        %s135 = smul.u32 16, %s16
        %p136 = scmp.lt.s32.totalorder %s15, 1
        %s137 = scalar_select %p136, %s15, 1
        %p138 = scmp.lt.s32.totalorder %s135, 15
        %s139 = scalar_select %p138, %s135, 15
        %p140 = scmp.lt.s32.totalorder %s17, 0
        %s141 = scalar_select %p140, %s17, 0
        %s142 = sadd.s32 %s141, %s139
        %s143 = smul.addr %s137, 16
        %s144 = sadd.s32 %s142, %s143
        %s145 = smul.addr %s144, 4
        %s146 = scalar_lea.vmem %s0, %s145
        %s147 = smul.u32 16, %s16
      $region20: #{gcn_forward.3} parent=15 // pred_fallthru
        _
      // Predicated region
      $region21: #{gcn_forward.3} parent=15 // pred_check
        %p148 = pneg %p79
      $region22: #{gcn_forward.3} parent=15 // pred_check_branch
        %150 = sbr.rel (%p148) target = $region24
      $region23: #{gcn_forward.3} parent=15 // pred_region
        %s151 = smul.u32 16, %s17
        %p152 = scmp.lt.s32.totalorder %s15, 1
        %s153 = scalar_select %p152, %s15, 1
        %p154 = scmp.lt.s32.totalorder %s151, 15
        %s155 = scalar_select %p154, %s151, 15
        %s156 = smul.addr %s153, 16
        %s157 = sadd.s32 %s155, %s156
        %s158 = smul.addr %s157, 4
        %s159 = scalar_lea.vmem %s1, %s158
        %s160 = smul.u32 16, %s17
      $region24: #{gcn_forward.3} parent=15 // pred_fallthru
        _
    $region16: #{gcn_forward.3} parent=5 // pred_fallthru
      _
    %p161 = scmp.le.s32.totalorder 1, %s8
    %p162 = scmp.lt.s32.totalorder %s8, 3
    %p163 = pnand %p161, %p162
    %p164 = pneg %p163
    // Predicated region
    $region25: #{gcn_forward.3} parent=5 // pred_check
      _
    $region26: #{gcn_forward.3} parent=5 // pred_check_branch
      %166 = sbr.rel (%p163) target = $region28
    $region27: #{gcn_forward.3} parent=5 // pred_region
      %s167 = ssub.s32 %s8, 1
      %s168 = smul.u32 16, %s19
      %p169 = scmp.lt.s32.totalorder %s18, 1
      %s170 = scalar_select %p169, %s18, 1
      %p171 = scmp.lt.s32.totalorder %s168, 15
      %s172 = scalar_select %p171, %s168, 15
      %p173 = scmp.lt.s32.totalorder %s20, 0
      %s174 = scalar_select %p173, %s20, 0
      %s175 = sadd.s32 %s174, %s172
      %s176 = smul.addr %s170, 16
      %s177 = sadd.s32 %s175, %s176
      %s178 = smul.addr %s177, 4
      %s179 = scalar_lea.vmem %s0, %s178
      %p180 = pneg %p57
      %p181 = pneg %p54
      %s182 = smul.u32 16, %s20
      %p183 = scmp.lt.s32.totalorder %s18, 1
      %s184 = scalar_select %p183, %s18, 1
      %p185 = scmp.lt.s32.totalorder %s182, 15
      %s186 = scalar_select %p185, %s182, 15
      %s187 = smul.addr %s184, 16
      %s188 = sadd.s32 %s186, %s187
      %s189 = smul.addr %s188, 4
      %s190 = scalar_lea.vmem %s1, %s189
      %p191 = pneg %p85
      %p192 = pneg %p82
      %p193 = pneg %p113
      %p194 = pneg %p110
      %s195 = smul.u32 16, %s19
      %p196 = scmp.lt.s32.totalorder %s18, 1
      %s197 = scalar_select %p196, %s18, 1
      %p198 = scmp.lt.s32.totalorder %s195, 15
      %s199 = scalar_select %p198, %s195, 15
      %s200 = smul.addr %s197, 16
      %s201 = sadd.s32 %s199, %s200
      %s202 = smul.addr %s201, 8
      %s203 = scalar_lea.vmem %s2, %s202
      %s204 = smul.u32 16, %s19
      %p205 = scmp.lt.s32.totalorder %s18, 1
      %s206 = scalar_select %p205, %s18, 1
      %p207 = scmp.lt.s32.totalorder %s204, 15
      %s208 = scalar_select %p207, %s204, 15
      %p209 = scmp.lt.s32.totalorder %s20, 0
      %s210 = scalar_select %p209, %s20, 0
      %s211 = sadd.s32 %s210, %s208
      %s212 = smul.addr %s206, 16
      %s213 = sadd.s32 %s211, %s212
      %s214 = smul.addr %s213, 4
      %s215 = scalar_lea.vmem %s0, %s214
      %s216 = smul.u32 16, %s19
      %s217 = smul.u32 16, %s20
      %p218 = scmp.lt.s32.totalorder %s18, 1
      %s219 = scalar_select %p218, %s18, 1
      %p220 = scmp.lt.s32.totalorder %s217, 15
      %s221 = scalar_select %p220, %s217, 15
      %s222 = smul.addr %s219, 16
      %s223 = sadd.s32 %s221, %s222
      %s224 = smul.addr %s223, 4
      %s225 = scalar_lea.vmem %s1, %s224
      %s226 = smul.u32 16, %s20
      %s227 = smul.u32 16, %s19
      %p228 = scmp.lt.s32.totalorder %s18, 1
      %s229 = scalar_select %p228, %s18, 1
      %p230 = scmp.lt.s32.totalorder %s227, 15
      %s231 = scalar_select %p230, %s227, 15
      %s232 = smul.addr %s229, 16
      %s233 = sadd.s32 %s231, %s232
      %s234 = smul.addr %s233, 8
      %s235 = scalar_lea.vmem %s2, %s234
      %s236 = smul.u32 16, %s19
      %p238 = scmp.eq.s32.totalorder %s20, 0
      // Predicated region
      $region29: #{gcn_forward.3} parent=27 // pred_check
        %p239 = pneg %p238
      $region30: #{gcn_forward.3} parent=27 // pred_check_branch
        %241 = sbr.rel (%p239) target = $region32
      $region31: #{gcn_forward.3} parent=27 // pred_region
        %242 = vst [vmem:[#allocation2] sm:$0xff] 0.0
        %243 = vst [vmem:[#allocation2 + $0x8] sm:$0xff] 0.0
        %244 = vst [vmem:[#allocation2 + $0x10] sm:$0xff] 0.0
        %245 = vst [vmem:[#allocation2 + $0x18] sm:$0xff] 0.0
        %246 = vst [vmem:[#allocation2 + $0x20] sm:$0xff] 0.0
        %247 = vst [vmem:[#allocation2 + $0x28] sm:$0xff] 0.0
        %248 = vst [vmem:[#allocation2 + $0x30] sm:$0xff] 0.0
        %249 = vst [vmem:[#allocation2 + $0x38] sm:$0xff] 0.0
        %250 = vst [vmem:[#allocation2 + $0x40] sm:$0xff] 0.0
        %251 = vst [vmem:[#allocation2 + $0x48] sm:$0xff] 0.0
        %252 = vst [vmem:[#allocation2 + $0x50] sm:$0xff] 0.0
        %253 = vst [vmem:[#allocation2 + $0x58] sm:$0xff] 0.0
        %254 = vst [vmem:[#allocation2 + $0x60] sm:$0xff] 0.0
        %255 = vst [vmem:[#allocation2 + $0x68] sm:$0xff] 0.0
        %256 = vst [vmem:[#allocation2 + $0x70] sm:$0xff] 0.0
        %257 = vst [vmem:[#allocation2 + $0x78] sm:$0xff] 0.0
      $region32: #{gcn_forward.3} parent=27 // pred_fallthru
        _
      %v258 = vld [vmem:[#allocation2] sm:$0xff]
      %v259 = vld [vmem:[#allocation2 + $0x8] sm:$0xff]
      %v260 = vld [vmem:[#allocation2 + $0x10] sm:$0xff]
      %v261 = vld [vmem:[#allocation2 + $0x18] sm:$0xff]
      %v262 = vld [vmem:[#allocation2 + $0x20] sm:$0xff]
      %v263 = vld [vmem:[#allocation2 + $0x28] sm:$0xff]
      %v264 = vld [vmem:[#allocation2 + $0x30] sm:$0xff]
      %v265 = vld [vmem:[#allocation2 + $0x38] sm:$0xff]
      %v266 = vld [vmem:[#allocation2 + $0x40] sm:$0xff]
      %v267 = vld [vmem:[#allocation2 + $0x48] sm:$0xff]
      %v268 = vld [vmem:[#allocation2 + $0x50] sm:$0xff]
      %v269 = vld [vmem:[#allocation2 + $0x58] sm:$0xff]
      %v270 = vld [vmem:[#allocation2 + $0x60] sm:$0xff]
      %v271 = vld [vmem:[#allocation2 + $0x68] sm:$0xff]
      %v272 = vld [vmem:[#allocation2 + $0x70] sm:$0xff]
      %v273 = vld [vmem:[#allocation2 + $0x78] sm:$0xff]
      %v274 = vld [vmem:[%s215] sm:$0xf]
      %v275 = vld [vmem:[%s215 + $0x4] sm:$0xf]
      %v276 = vld [vmem:[%s215 + $0x8] sm:$0xf]
      %v277 = vld [vmem:[%s215 + $0xc] sm:$0xf]
      %v278 = vld [vmem:[%s215 + $0x10] sm:$0xf]
      %v279 = vld [vmem:[%s215 + $0x14] sm:$0xf]
      %v280 = vld [vmem:[%s215 + $0x18] sm:$0xf]
      %v281 = vld [vmem:[%s215 + $0x1c] sm:$0xf]
      %v282 = vld [vmem:[%s215 + $0x20] sm:$0xf]
      %v283 = vld [vmem:[%s215 + $0x24] sm:$0xf]
      %v284 = vld [vmem:[%s215 + $0x28] sm:$0xf]
      %v285 = vld [vmem:[%s215 + $0x2c] sm:$0xf]
      %v286 = vld [vmem:[%s215 + $0x30] sm:$0xf]
      %v287 = vld [vmem:[%s215 + $0x34] sm:$0xf]
      %v288 = vld [vmem:[%s215 + $0x38] sm:$0xf]
      %v289 = vld [vmem:[%s215 + $0x3c] sm:$0xf]
      %v290 = vld [vmem:[%s225] sm:$0xf]
      %v291 = vld [vmem:[%s225 + $0x4] sm:$0xf]
      %v292 = vld [vmem:[%s225 + $0x8] sm:$0xf]
      %v293 = vld [vmem:[%s225 + $0xc] sm:$0xf]
      %v294 = vld [vmem:[%s225 + $0x10] sm:$0xf]
      %v295 = vld [vmem:[%s225 + $0x14] sm:$0xf]
      %v296 = vld [vmem:[%s225 + $0x18] sm:$0xf]
      %v297 = vld [vmem:[%s225 + $0x1c] sm:$0xf]
      %v298 = vld [vmem:[%s225 + $0x20] sm:$0xf]
      %v299 = vld [vmem:[%s225 + $0x24] sm:$0xf]
      %v300 = vld [vmem:[%s225 + $0x28] sm:$0xf]
      %v301 = vld [vmem:[%s225 + $0x2c] sm:$0xf]
      %v302 = vld [vmem:[%s225 + $0x30] sm:$0xf]
      %v303 = vld [vmem:[%s225 + $0x34] sm:$0xf]
      %v304 = vld [vmem:[%s225 + $0x38] sm:$0xf]
      %v305 = vld [vmem:[%s225 + $0x3c] sm:$0xf]
      %v322 = vunpack.c.l.b16 %v274
      %v323 = vunpack.c.l.b16 %v275
      %v324 = vunpack.c.l.b16 %v276
      %v325 = vunpack.c.l.b16 %v277
      %v326 = vunpack.c.l.b16 %v278
      %v327 = vunpack.c.l.b16 %v279
      %v328 = vunpack.c.l.b16 %v280
      %v329 = vunpack.c.l.b16 %v281
      %v330 = vunpack.c.l.b16 %v282
      %v331 = vunpack.c.l.b16 %v283
      %v332 = vunpack.c.l.b16 %v284
      %v333 = vunpack.c.l.b16 %v285
      %v334 = vunpack.c.l.b16 %v286
      %v335 = vunpack.c.l.b16 %v287
      %v336 = vunpack.c.l.b16 %v288
      %v337 = vunpack.c.l.b16 %v289
      %v338 = vpack.c.b16 %v323, %v322
      %v339 = vpack.c.b16 %v325, %v324
      %v340 = vpack.c.b16 %v327, %v326
      %v341 = vpack.c.b16 %v329, %v328
      %v342 = vpack.c.b16 %v331, %v330
      %v343 = vpack.c.b16 %v333, %v332
      %v344 = vpack.c.b16 %v335, %v334
      %v345 = vpack.c.b16 %v337, %v336
      %v370 = vunpack.c.l.b16 %v290
      %v371 = vunpack.c.l.b16 %v291
      %v372 = vunpack.c.l.b16 %v292
      %v373 = vunpack.c.l.b16 %v293
      %v374 = vunpack.c.l.b16 %v294
      %v375 = vunpack.c.l.b16 %v295
      %v376 = vunpack.c.l.b16 %v296
      %v377 = vunpack.c.l.b16 %v297
      %v378 = vunpack.c.l.b16 %v298
      %v379 = vunpack.c.l.b16 %v299
      %v380 = vunpack.c.l.b16 %v300
      %v381 = vunpack.c.l.b16 %v301
      %v382 = vunpack.c.l.b16 %v302
      %v383 = vunpack.c.l.b16 %v303
      %v384 = vunpack.c.l.b16 %v304
      %v385 = vunpack.c.l.b16 %v305
      %v386 = vpack.c.b16 %v371, %v370
      %v387 = vpack.c.b16 %v373, %v372
      %v388 = vpack.c.b16 %v375, %v374
      %v389 = vpack.c.b16 %v377, %v376
      %v390 = vpack.c.b16 %v379, %v378
      %v391 = vpack.c.b16 %v381, %v380
      %v392 = vpack.c.b16 %v383, %v382
      %v393 = vpack.c.b16 %v385, %v384
      %402 = vmatprep.subr.bf16.mxu0 0
      %403 = vmatpush1.bf16.msra.mxu0 %v386
      %404 = vmatprep.subr.bf16.mxu0 0
      %405 = vmatpush1.bf16.msra.mxu0 %v387
      %406 = vmatprep.subr.bf16.mxu0 0
      %407 = vmatpush1.bf16.msra.mxu0 %v388
      %408 = vmatprep.subr.bf16.mxu0 0
      %409 = vmatpush1.bf16.msra.mxu0 %v389
      %410 = vmatprep.subr.bf16.mxu0 0
      %411 = vmatpush1.bf16.msra.mxu0 %v390
      %412 = vmatprep.subr.bf16.mxu0 0
      %413 = vmatpush1.bf16.msra.mxu0 %v391
      %414 = vmatprep.subr.bf16.mxu0 0
      %415 = vmatpush1.bf16.msra.mxu0 %v392
      %416 = vmatprep.subr.bf16.mxu0 0
      %417 = vmatpush1.bf16.msra.mxu0 %v393
      %418 = vmatprep.subr.bf16.mxu0 0
      %419 = vmatpush1.bf16.msra.mxu0 0
      %420 = vmatprep.subr.bf16.mxu0 0
      %421 = vmatpush1.bf16.msra.mxu0 0
      %422 = vmatprep.subr.bf16.mxu0 0
      %423 = vmatpush1.bf16.msra.mxu0 0
      %424 = vmatprep.subr.bf16.mxu0 0
      %425 = vmatpush1.bf16.msra.mxu0 0
      %426 = vmatprep.subr.bf16.mxu0 0
      %427 = vmatpush1.bf16.msra.mxu0 0
      %428 = vmatprep.subr.bf16.mxu0 0
      %429 = vmatpush1.bf16.msra.mxu0 0
      %430 = vmatprep.subr.bf16.mxu0 0
      %431 = vmatpush1.bf16.msra.mxu0 0
      %432 = vmatprep.subr.bf16.mxu0 0
      %433 = vmatpush1.bf16.msra.mxu0 0
      %434 = vmatprep.mubr.bf16.mxu0 0
      %435 = vmatmul.mubr.bf16.gmra.mrb[0].mxu0 %v338
      %v436 = vpop.f32.mrb[0].mxu0
      %v437 = vadd.f32 0.0, %v436
      %v438 = vpop.f32.mrb[0].mxu0
      %v439 = vpop.f32.mrb[0].mxu0
      %v440 = vadd.f32 0.0, %v439
      %v441 = vpop.f32.mrb[0].mxu0
      %442 = vmatprep.mubr.bf16.mxu0 0
      %443 = vmatmul.mubr.bf16.gmra.mrb[0].mxu0 %v339
      %v444 = vpop.f32.mrb[0].mxu0
      %v445 = vadd.f32 0.0, %v444
      %v446 = vpop.f32.mrb[0].mxu0
      %v447 = vpop.f32.mrb[0].mxu0
      %v448 = vadd.f32 0.0, %v447
      %v449 = vpop.f32.mrb[0].mxu0
      %450 = vmatprep.mubr.bf16.mxu0 0
      %451 = vmatmul.mubr.bf16.gmra.mrb[0].mxu0 %v340
      %v452 = vpop.f32.mrb[0].mxu0
      %v453 = vadd.f32 0.0, %v452
      %v454 = vpop.f32.mrb[0].mxu0
      %v455 = vpop.f32.mrb[0].mxu0
      %v456 = vadd.f32 0.0, %v455
      %v457 = vpop.f32.mrb[0].mxu0
      %458 = vmatprep.mubr.bf16.mxu0 0
      %459 = vmatmul.mubr.bf16.gmra.mrb[0].mxu0 %v341
      %v460 = vpop.f32.mrb[0].mxu0
      %v461 = vadd.f32 0.0, %v460
      %v462 = vpop.f32.mrb[0].mxu0
      %v463 = vpop.f32.mrb[0].mxu0
      %v464 = vadd.f32 0.0, %v463
      %v465 = vpop.f32.mrb[0].mxu0
      %466 = vmatprep.mubr.bf16.mxu0 0
      %467 = vmatmul.mubr.bf16.gmra.mrb[0].mxu0 %v342
      %v468 = vpop.f32.mrb[0].mxu0
      %v469 = vadd.f32 0.0, %v468
      %v470 = vpop.f32.mrb[0].mxu0
      %v471 = vpop.f32.mrb[0].mxu0
      %v472 = vadd.f32 0.0, %v471
      %v473 = vpop.f32.mrb[0].mxu0
      %474 = vmatprep.mubr.bf16.mxu0 0
      %475 = vmatmul.mubr.bf16.gmra.mrb[0].mxu0 %v343
      %v476 = vpop.f32.mrb[0].mxu0
      %v477 = vadd.f32 0.0, %v476
      %v478 = vpop.f32.mrb[0].mxu0
      %v479 = vpop.f32.mrb[0].mxu0
      %v480 = vadd.f32 0.0, %v479
      %v481 = vpop.f32.mrb[0].mxu0
      %482 = vmatprep.mubr.bf16.mxu0 0
      %483 = vmatmul.mubr.bf16.gmra.mrb[0].mxu0 %v344
      %v484 = vpop.f32.mrb[0].mxu0
      %v485 = vadd.f32 0.0, %v484
      %v486 = vpop.f32.mrb[0].mxu0
      %v487 = vpop.f32.mrb[0].mxu0
      %v488 = vadd.f32 0.0, %v487
      %v489 = vpop.f32.mrb[0].mxu0
      %490 = vmatprep.mubr.bf16.mxu0 0
      %491 = vmatmul.mubr.bf16.gmra.mrb[0].mxu0 %v345
      %v492 = vpop.f32.mrb[0].mxu0
      %v493 = vadd.f32 0.0, %v492
      %v494 = vpop.f32.mrb[0].mxu0
      %v495 = vpop.f32.mrb[0].mxu0
      %v496 = vadd.f32 0.0, %v495
      %v497 = vpop.f32.mrb[0].mxu0
      %498 = vdwg.mxu0
      %v499 = vadd.f32 %v258, %v437
      %v500 = vadd.f32 %v259, %v440
      %v501 = vadd.f32 %v260, %v445
      %v502 = vadd.f32 %v261, %v448
      %v503 = vadd.f32 %v262, %v453
      %v504 = vadd.f32 %v263, %v456
      %v505 = vadd.f32 %v264, %v461
      %v506 = vadd.f32 %v265, %v464
      %v507 = vadd.f32 %v266, %v469
      %v508 = vadd.f32 %v267, %v472
      %v509 = vadd.f32 %v268, %v477
      %v510 = vadd.f32 %v269, %v480
      %v511 = vadd.f32 %v270, %v485
      %v512 = vadd.f32 %v271, %v488
      %v513 = vadd.f32 %v272, %v493
      %v514 = vadd.f32 %v273, %v496
      %515 = vst [vmem:[#allocation2] sm:$0xff] %v499
      %516 = vst [vmem:[#allocation2 + $0x8] sm:$0xff] %v500
      %517 = vst [vmem:[#allocation2 + $0x10] sm:$0xff] %v501
      %518 = vst [vmem:[#allocation2 + $0x18] sm:$0xff] %v502
      %519 = vst [vmem:[#allocation2 + $0x20] sm:$0xff] %v503
      %520 = vst [vmem:[#allocation2 + $0x28] sm:$0xff] %v504
      %521 = vst [vmem:[#allocation2 + $0x30] sm:$0xff] %v505
      %522 = vst [vmem:[#allocation2 + $0x38] sm:$0xff] %v506
      %523 = vst [vmem:[#allocation2 + $0x40] sm:$0xff] %v507
      %524 = vst [vmem:[#allocation2 + $0x48] sm:$0xff] %v508
      %525 = vst [vmem:[#allocation2 + $0x50] sm:$0xff] %v509
      %526 = vst [vmem:[#allocation2 + $0x58] sm:$0xff] %v510
      %527 = vst [vmem:[#allocation2 + $0x60] sm:$0xff] %v511
      %528 = vst [vmem:[#allocation2 + $0x68] sm:$0xff] %v512
      %529 = vst [vmem:[#allocation2 + $0x70] sm:$0xff] %v513
      %530 = vst [vmem:[#allocation2 + $0x78] sm:$0xff] %v514
      // Predicated region
      $region33: #{gcn_forward.3} parent=27 // pred_check
        %p531 = pneg %p238
      $region34: #{gcn_forward.3} parent=27 // pred_check_branch
        %533 = sbr.rel (%p531) target = $region36
      $region35: #{gcn_forward.3} parent=27 // pred_region
        %v534 = vld [vmem:[#allocation2] sm:$0xff]
        %v535 = vld [vmem:[#allocation2 + $0x8] sm:$0xff]
        %v536 = vld [vmem:[#allocation2 + $0x10] sm:$0xff]
        %v537 = vld [vmem:[#allocation2 + $0x18] sm:$0xff]
        %v538 = vld [vmem:[#allocation2 + $0x20] sm:$0xff]
        %v539 = vld [vmem:[#allocation2 + $0x28] sm:$0xff]
        %v540 = vld [vmem:[#allocation2 + $0x30] sm:$0xff]
        %v541 = vld [vmem:[#allocation2 + $0x38] sm:$0xff]
        %v542 = vld [vmem:[#allocation2 + $0x40] sm:$0xff]
        %v543 = vld [vmem:[#allocation2 + $0x48] sm:$0xff]
        %v544 = vld [vmem:[#allocation2 + $0x50] sm:$0xff]
        %v545 = vld [vmem:[#allocation2 + $0x58] sm:$0xff]
        %v546 = vld [vmem:[#allocation2 + $0x60] sm:$0xff]
        %v547 = vld [vmem:[#allocation2 + $0x68] sm:$0xff]
        %v548 = vld [vmem:[#allocation2 + $0x70] sm:$0xff]
        %v549 = vld [vmem:[#allocation2 + $0x78] sm:$0xff]
        %550 = vst [vmem:[%s235] sm:$0xff] %v534
        %551 = vst [vmem:[%s235 + $0x8] sm:$0xff] %v535
        %552 = vst [vmem:[%s235 + $0x10] sm:$0xff] %v536
        %553 = vst [vmem:[%s235 + $0x18] sm:$0xff] %v537
        %554 = vst [vmem:[%s235 + $0x20] sm:$0xff] %v538
        %555 = vst [vmem:[%s235 + $0x28] sm:$0xff] %v539
        %556 = vst [vmem:[%s235 + $0x30] sm:$0xff] %v540
        %557 = vst [vmem:[%s235 + $0x38] sm:$0xff] %v541
        %558 = vst [vmem:[%s235 + $0x40] sm:$0xff] %v542
        %559 = vst [vmem:[%s235 + $0x48] sm:$0xff] %v543
        %560 = vst [vmem:[%s235 + $0x50] sm:$0xff] %v544
        %561 = vst [vmem:[%s235 + $0x58] sm:$0xff] %v545
        %562 = vst [vmem:[%s235 + $0x60] sm:$0xff] %v546
        %563 = vst [vmem:[%s235 + $0x68] sm:$0xff] %v547
        %564 = vst [vmem:[%s235 + $0x70] sm:$0xff] %v548
        %565 = vst [vmem:[%s235 + $0x78] sm:$0xff] %v549
      $region36: #{gcn_forward.3} parent=27 // pred_fallthru
        _
      %s566 = smul.u32 16, %s19
      %p567 = scmp.lt.s32.totalorder %s18, 1
      %s568 = scalar_select %p567, %s18, 1
      %p569 = scmp.lt.s32.totalorder %s566, 15
      %s570 = scalar_select %p569, %s566, 15
      %s571 = smul.addr %s568, 16
      %s572 = sadd.s32 %s570, %s571
      %s573 = smul.addr %s572, 8
      %s574 = scalar_lea.vmem %s2, %s573
      // Predicated region
      $region37: #{gcn_forward.3} parent=27 // pred_check
        %p575 = pneg %p110
      $region38: #{gcn_forward.3} parent=27 // pred_check_branch
        %577 = sbr.rel (%p575) target = $region40
      $region39: #{gcn_forward.3} parent=27 // pred_region
        %s578 = smul.u32 16, %s19
      $region40: #{gcn_forward.3} parent=27 // pred_fallthru
        _
    $region28: #{gcn_forward.3} parent=5 // pred_fallthru
      _
    %p579 = scmp.le.s32.totalorder 2, %s8
    // Predicated region
    $region41: #{gcn_forward.3} parent=5 // pred_check
      %p580 = pneg %p579
    $region42: #{gcn_forward.3} parent=5 // pred_check_branch
      %582 = sbr.rel (%p580) target = $region44
    $region43: #{gcn_forward.3} parent=5 // pred_region
      %s583 = ssub.s32 %s8, 2
      // Predicated region
      $region45: #{gcn_forward.3} parent=43 // pred_check
        %p584 = pneg %p116
      $region46: #{gcn_forward.3} parent=43 // pred_check_branch
        %586 = sbr.rel (%p584) target = $region48
      $region47: #{gcn_forward.3} parent=43 // pred_region
        %s587 = smul.u32 16, %s22
        %p588 = scmp.lt.s32.totalorder %s21, 1
        %s589 = scalar_select %p588, %s21, 1
        %p590 = scmp.lt.s32.totalorder %s587, 15
        %s591 = scalar_select %p590, %s587, 15
        %s592 = smul.addr %s589, 16
        %s593 = sadd.s32 %s591, %s592
        %s594 = smul.addr %s593, 8
        %s595 = scalar_lea.vmem %s2, %s594
      $region48: #{gcn_forward.3} parent=43 // pred_fallthru
        _
    $region44: #{gcn_forward.3} parent=5 // pred_fallthru
      _
  $region6: #{gcn_forward.3} parent=0 // loop_footer
    %s12 = sadd.s32 1, %s8
  $region7: #{gcn_forward.3} parent=0 // loop_footer_branch
    %7 = sbr.rel target = $region3
  $region8: #{gcn_forward.3} parent=0 // loop_exit
    _

</llo_original>
